<compile_context>
chip_gen: v5e
topology: v5e:2x2
jax: 0.10.0
libtpu: 0.0.40
codegen_flags: <defaults>
</compile_context>

<pallas_src>
import math

import jax
import jax.numpy as jnp
from jax import lax
from jax.experimental import pallas as pl
from jax.experimental.pallas import tpu as pltpu


def _round_up(x, n):
    return ((x + n - 1) // n) * n


# -----------------------------------------------------------------------------
# Kernels
# -----------------------------------------------------------------------------
def _ffn_resident_kernel(x_ref, w1_ref, b1_ref, w2_ref, b2_ref, o_ref):
    """Whole FFN for one row tile; both weight matrices are VMEM-resident.

    x: (tm, d_in)  w1: (H, d_in)  b1: (1, H)  w2: (d_out, H)  b2: (1, d_out).
    PyTorch (out, in) weight layout is kept; contraction over the last dim of
    both operands is the MXU's native trans_b path (no transpose materialized).
    """
    hidden = lax.dot_general(
        x_ref[...], w1_ref[...],
        dimension_numbers=(((1,), (1,)), ((), ())),
        preferred_element_type=jnp.float32)
    hidden = jnp.maximum(hidden + b1_ref[...], 0.0)
    out = lax.dot_general(
        hidden.astype(w2_ref.dtype), w2_ref[...],
        dimension_numbers=(((1,), (1,)), ((), ())),
        preferred_element_type=jnp.float32)
    o_ref[...] = (out + b2_ref[...]).astype(o_ref.dtype)


def _ffn_stream_kernel(x_ref, w1_ref, b1_ref, w2_ref, b2_ref, o_ref, acc_ref):
    """Streaming fallback: hidden dim tiled on the trailing reduction axis."""
    h = pl.program_id(1)

    @pl.when(h == 0)
    def _():
        acc_ref[...] = jnp.zeros_like(acc_ref)

    hidden = lax.dot_general(
        x_ref[...], w1_ref[...],
        dimension_numbers=(((1,), (1,)), ((), ())),
        preferred_element_type=jnp.float32)
    hidden = jnp.maximum(hidden + b1_ref[...], 0.0)
    acc_ref[...] += lax.dot_general(
        hidden.astype(w2_ref.dtype), w2_ref[...],
        dimension_numbers=(((1,), (1,)), ((), ())),
        preferred_element_type=jnp.float32)

    @pl.when(h == pl.num_programs(1) - 1)
    def _():
        o_ref[...] = (acc_ref[...] + b2_ref[...]).astype(o_ref.dtype)


# -----------------------------------------------------------------------------
# Wrapper
# -----------------------------------------------------------------------------
def _vmem_capacity_bytes():
    try:
        cap = int(pltpu.get_tpu_info().vmem_capacity_bytes)
        if cap > 0:
            return cap
    except Exception:
        pass
    return 64 * 1024 * 1024  # conservative default (v7x per-TC VMEM)


def feed_forward(x, w1, b1, w2, b2, *, compute_dtype=jnp.bfloat16,
                 force_streaming=False):
    """x: (..., D_in); w1: (H, D_in); b1: (H,); w2: (D_out, H); b2: (D_out,)."""
    orig_lead = x.shape[:-1]
    d_in = int(x.shape[-1])
    hidden_dim, d_in_w = (int(s) for s in w1.shape)
    d_out, hidden_w = (int(s) for s in w2.shape)
    assert d_in_w == d_in and hidden_w == hidden_dim

    m = 1
    for s in orig_lead:
        m *= int(s)

    csz = jnp.dtype(compute_dtype).itemsize
    osz = jnp.dtype(x.dtype).itemsize

    # Lane-dense output: pad d_out to a multiple of 128 (zero rows in W2 and
    # zeros in b2, sliced off afterwards) so output stores are unmasked.
    d_out_p = _round_up(d_out, 128)

    vmem_cap = _vmem_capacity_bytes()
    budget = int(vmem_cap * 0.75)  # headroom for Mosaic internal scratch

    weight_bytes = ((hidden_dim * d_in + d_out_p * hidden_dim) * csz
                    + (hidden_dim + d_out_p) * 4)

    def resident_need(tm):
        return (2 * weight_bytes                      # weights+biases (safe x2)
                + 2 * tm * d_in * csz                 # double-buffered x tile
                + 2 * tm * d_out_p * osz              # double-buffered out tile
                + tm * hidden_dim * (4 + csz)         # f32 hidden + cast copy
                + (2 << 20))

    m8 = _round_up(m, 8)
    resident = (not force_streaming) and resident_need(min(256, m8)) <= budget

    def pick_tm(need_fn):
        tm = 8
        for cand in (16, 32, 64, 128, 256, 512, 1024, 2048):
            if cand > m8:
                break
            if need_fn(cand) <= budget:
                tm = cand
        # Megacore (v7x has 2 TensorCores): prefer >= 2 row tiles.
        if m8 >= 16 and -(-m8 // tm) < 2:
            tm = max(8, tm // 2)
        return tm

    th = 128
    if resident:
        hidden_p = hidden_dim            # full-dim weight blocks, no padding
        tm = pick_tm(resident_need)
        m_p = _round_up(m, tm)
        grid = (m_p // tm,)
        vmem_needed = resident_need(tm)
    else:
        hidden_p = _round_up(hidden_dim, 128)
        for cand in (512, 256):
            if hidden_p % cand == 0 and \
               2 * (cand * d_in + d_out_p * cand) * csz <= budget // 2:
                th = cand
                break

        def stream_need(tm):
            return (2 * (th * d_in + d_out_p * th) * csz  # W1/W2 tiles (dbl buf)
                    + 2 * th * 4 + 2 * d_out_p * 4        # b1 tile, b2
                    + 2 * tm * d_in * csz                 # x tile
                    + 2 * tm * d_out_p * osz              # out tile
                    + tm * d_out_p * 4                    # f32 accumulator
                    + tm * th * (4 + csz)                 # hidden temp
                    + (2 << 20))

        tm = pick_tm(stream_need)
        m_p = _round_up(m, tm)
        grid = (m_p // tm, hidden_p // th)
        vmem_needed = stream_need(tm)

    vmem_limit = int(min(max(vmem_needed, 32 * 1024 * 1024), budget))

    # ---- pad + cast operands (PyTorch (out,in) layout kept; cast is a no-op
    # ---- when weights are already in compute_dtype) --------------------------
    x2 = x.reshape(m, d_in)
    if m_p != m:
        x2 = jnp.pad(x2, ((0, m_p - m), (0, 0)))
    x2 = x2.astype(compute_dtype)

    w1c = w1
    b1r = b1
    if hidden_p != hidden_dim:
        w1c = jnp.pad(w1c, ((0, hidden_p - hidden_dim), (0, 0)))
        b1r = jnp.pad(b1r, (0, hidden_p - hidden_dim))
    w1c = w1c.astype(compute_dtype)
    b1r = b1r.reshape(1, hidden_p).astype(jnp.float32)

    w2c = w2
    b2r = b2
    if d_out_p != d_out or hidden_p != hidden_dim:
        w2c = jnp.pad(w2c, ((0, d_out_p - d_out), (0, hidden_p - hidden_dim)))
    if d_out_p != d_out:
        b2r = jnp.pad(b2r, (0, d_out_p - d_out))
    w2c = w2c.astype(compute_dtype)
    b2r = b2r.reshape(1, d_out_p).astype(jnp.float32)

    flops = 2 * m * d_in * hidden_dim + 2 * m * hidden_dim * d_out
    bytes_accessed = (m * d_in * csz
                      + (hidden_dim * d_in + d_out * hidden_dim) * csz
                      + (hidden_dim + d_out) * 4 + m * d_out * osz)
    cost = pl.CostEstimate(flops=int(flops), transcendentals=0,
                           bytes_accessed=int(bytes_accessed))
    cparams = pltpu.CompilerParams(
        dimension_semantics=("parallel",) if resident else ("parallel", "arbitrary"),
        vmem_limit_bytes=vmem_limit)
    out_shape = jax.ShapeDtypeStruct((m_p, d_out_p), x.dtype)

    def run(single_buffer_consts):
        def const_spec(shape, imap):
            # Constant-index blocks do not need double buffering.
            if single_buffer_consts:
                return pl.BlockSpec(shape, imap, pipeline_mode=pl.Buffered(1))
            return pl.BlockSpec(shape, imap)

        if resident:
            grid_spec = pltpu.PrefetchScalarGridSpec(
                num_scalar_prefetch=0, grid=grid,
                in_specs=[
                    pl.BlockSpec((tm, d_in), lambda i: (i, 0)),
                    const_spec((hidden_p, d_in), lambda i: (0, 0)),
                    const_spec((1, hidden_p), lambda i: (0, 0)),
                    const_spec((d_out_p, hidden_p), lambda i: (0, 0)),
                    const_spec((1, d_out_p), lambda i: (0, 0)),
                ],
                out_specs=pl.BlockSpec((tm, d_out_p), lambda i: (i, 0)))
            kernel = _ffn_resident_kernel
        else:
            grid_spec = pltpu.PrefetchScalarGridSpec(
                num_scalar_prefetch=0, grid=grid,
                in_specs=[
                    pl.BlockSpec((tm, d_in), lambda i, h: (i, 0)),
                    pl.BlockSpec((th, d_in), lambda i, h: (h, 0)),
                    pl.BlockSpec((1, th), lambda i, h: (0, h)),
                    pl.BlockSpec((d_out_p, th), lambda i, h: (0, h)),
                    const_spec((1, d_out_p), lambda i, h: (0, 0)),
                ],
                out_specs=pl.BlockSpec((tm, d_out_p), lambda i, h: (i, 0)),
                scratch_shapes=[pltpu.VMEM((tm, d_out_p), jnp.float32)])
            kernel = _ffn_stream_kernel

        return pl.pallas_call(
            kernel, out_shape=out_shape, grid_spec=grid_spec,
            compiler_params=cparams, cost_estimate=cost,
        )(x2, w1c, b1r, w2c, b2r)

    try:
        out2 = run(True)
    except Exception:
        # Safety net: if single-buffered (pl.Buffered(1)) constant blocks are
        # rejected by this jax/Mosaic build, retry with default pipelining.
        out2 = run(False)

    out2 = out2[:m, :d_out]
    return out2.reshape(orig_lead + (d_out,))


# -----------------------------------------------------------------------------
# References
# -----------------------------------------------------------------------------
def _reference_f32(x, w1, b1, w2, b2):
    """Pure-f32 JAX reference mirroring the PyTorch module exactly."""
    h = jnp.maximum(x @ w1.T + b1, 0.0)
    return h @ w2.T + b2


def _reference_matched(x, w1, b1, w2, b2, compute_dtype):
    """Reference doing the same bf16-operand / f32-accumulate math as the kernel."""
    xc = x.astype(compute_dtype)
    h = jnp.dot(xc, w1.T.astype(compute_dtype),
                preferred_element_type=jnp.float32) + b1.astype(jnp.float32)
    h = jnp.maximum(h, 0.0)
    out = jnp.dot(h.astype(compute_dtype), w2.T.astype(compute_dtype),
                  preferred_element_type=jnp.float32) + b2.astype(jnp.float32)
    return out.astype(x.dtype)


def _make_params(key, input_dim, hidden_dim, output_dim):
    k1, kb1, k2, kb2 = jax.random.split(key, 4)
    bound1 = 1.0 / math.sqrt(input_dim)
    w1 = jax.random.uniform(k1, (hidden_dim, input_dim), jnp.float32, -bound1, bound1)
    b1 = jax.random.uniform(kb1, (hidden_dim,), jnp.float32, -bound1, bound1)
    bound2 = 1.0 / math.sqrt(hidden_dim)
    w2 = jax.random.uniform(k2, (output_dim, hidden_dim), jnp.float32, -bound2, bound2)
    b2 = jax.random.uniform(kb2, (output_dim,), jnp.float32, -bound2, bound2)
    return w1, b1, w2, b2


if __name__ == "__main__":
    key = jax.random.PRNGKey(0)
    kx1, kp1, kx2, kp2 = jax.random.split(key, 4)

    # --- case 1: small module-consistent shapes (resident-weights fast path) ---
    B, S = 2, 8
    input_dim, hidden_dim, output_dim = 32, 64, 32
    x = jax.random.normal(kx1, (B, S, input_dim), dtype=jnp.float32)
    w1, b1, w2, b2 = _make_params(kp1, input_dim, hidden_dim, output_dim)

    out = jax.block_until_ready(feed_forward(x, w1, b1, w2, b2))
    assert out.shape == (B, S, output_dim)
    assert jnp.allclose(out, _reference_matched(x, w1, b1, w2, b2, jnp.bfloat16),
                        atol=2e-3, rtol=2e-3)
    assert jnp.allclose(out, _reference_f32(x, w1, b1, w2, b2),
                        atol=5e-2, rtol=5e-2)

    # --- case 2: non-divisible shapes (exercises padding + multiple row tiles),
    #             both the resident path and the forced streaming fallback -----
    B2, S2 = 2, 24
    d_in2, h2, d_out2 = 40, 272, 48
    x2 = jax.random.normal(kx2, (B2, S2, d_in2), dtype=jnp.float32)
    w1b, b1b, w2b, b2b = _make_params(kp2, d_in2, h2, d_out2)
    ref_m = _reference_matched(x2, w1b, b1b, w2b, b2b, jnp.bfloat16)
    ref_f = _reference_f32(x2, w1b, b1b, w2b, b2b)

    out_res = jax.block_until_ready(feed_forward(x2, w1b, b1b, w2b, b2b))
    out_str = jax.block_until_ready(
        feed_forward(x2, w1b, b1b, w2b, b2b, force_streaming=True))
    for o in (out_res, out_str):
        assert o.shape == (B2, S2, d_out2)
        assert jnp.allclose(o, ref_m, atol=2e-3, rtol=2e-3)
        assert jnp.allclose(o, ref_f, atol=5e-2, rtol=5e-2)

    print("KERNEL_OK")
</pallas_src>

<mosaic_0001>
module attributes {stable_mosaic.version = 11 : i64} {
  func.func @_ffn_resident_kernel(%arg0: i32, %arg1: memref<8x32xbf16, #tpu.memory_space<vmem>>, %arg2: memref<64x32xbf16, #tpu.memory_space<vmem>>, %arg3: memref<1x64xf32, #tpu.memory_space<vmem>>, %arg4: memref<128x64xbf16, #tpu.memory_space<vmem>>, %arg5: memref<1x128xf32, #tpu.memory_space<vmem>>, %arg6: memref<8x128xf32, #tpu.memory_space<vmem>>) attributes {dimension_semantics = [#tpu.dimension_semantics<parallel>], iteration_bounds = array<i64: 2>, scalar_prefetch = 0 : i64, scratch_operands = 0 : i64, tpu.core_type = #tpu.core_type<tc>, window_params = [{transform_indices = @transform_0, window_bounds = array<i64: 8, 32>}, {pipeline_mode = #tpu.pipeline_mode<synchronous>, transform_indices = @transform_1, window_bounds = array<i64: 64, 32>}, {pipeline_mode = #tpu.pipeline_mode<synchronous>, transform_indices = @transform_2, window_bounds = array<i64: 1, 64>}, {pipeline_mode = #tpu.pipeline_mode<synchronous>, transform_indices = @transform_3, window_bounds = array<i64: 128, 64>}, {pipeline_mode = #tpu.pipeline_mode<synchronous>, transform_indices = @transform_4, window_bounds = array<i64: 1, 128>}, {transform_indices = @transform_5, window_bounds = array<i64: 8, 128>}]} {
    %c0 = arith.constant 0 : index
    %c0_0 = arith.constant 0 : index
    %0 = vector.load %arg1[%c0, %c0_0] : memref<8x32xbf16, #tpu.memory_space<vmem>>, vector<8x32xbf16>
    %c0_1 = arith.constant 0 : index
    %c0_2 = arith.constant 0 : index
    %1 = vector.load %arg2[%c0_1, %c0_2] : memref<64x32xbf16, #tpu.memory_space<vmem>>, vector<64x32xbf16>
    %cst = arith.constant dense<0.000000e+00> : vector<8x64xf32>
    %2 = tpu.matmul %0, %1, %cst {dimension_numbers = #tpu.dot_dimension_numbers<[1], [1], [0], [0], [0, 0, 1, 0], [], []>} : vector<8x32xbf16>, vector<64x32xbf16>, vector<8x64xf32> -> vector<8x64xf32>
    %c0_3 = arith.constant 0 : index
    %c0_4 = arith.constant 0 : index
    %3 = vector.load %arg3[%c0_3, %c0_4] : memref<1x64xf32, #tpu.memory_space<vmem>>, vector<1x64xf32>
    %4 = vector.broadcast %3 : vector<1x64xf32> to vector<8x64xf32>
    %5 = arith.addf %2, %4 : vector<8x64xf32>
    %cst_5 = arith.constant 0.000000e+00 : f32
    %6 = vector.broadcast %cst_5 : f32 to vector<8x64xf32>
    %7 = arith.maximumf %5, %6 : vector<8x64xf32>
    %8 = arith.truncf %7 : vector<8x64xf32> to vector<8x64xbf16>
    %c0_6 = arith.constant 0 : index
    %c0_7 = arith.constant 0 : index
    %9 = vector.load %arg4[%c0_6, %c0_7] : memref<128x64xbf16, #tpu.memory_space<vmem>>, vector<128x64xbf16>
    %cst_8 = arith.constant dense<0.000000e+00> : vector<8x128xf32>
    %10 = tpu.matmul %8, %9, %cst_8 {dimension_numbers = #tpu.dot_dimension_numbers<[1], [1], [0], [0], [0, 0, 1, 0], [], []>} : vector<8x64xbf16>, vector<128x64xbf16>, vector<8x128xf32> -> vector<8x128xf32>
    %c0_9 = arith.constant 0 : index
    %c0_10 = arith.constant 0 : index
    %11 = vector.load %arg5[%c0_9, %c0_10] : memref<1x128xf32, #tpu.memory_space<vmem>>, vector<1x128xf32>
    %12 = vector.broadcast %11 : vector<1x128xf32> to vector<8x128xf32>
    %13 = arith.addf %10, %12 : vector<8x128xf32>
    %c0_11 = arith.constant 0 : index
    %c0_12 = arith.constant 0 : index
    %14 = vector.load %arg6[%c0_11, %c0_12] : memref<8x128xf32, #tpu.memory_space<vmem>>, vector<8x128xf32>
    tpu.vector_store %arg6[%c0_11, %c0_12], %13 {strides = array<i32>} : memref<8x128xf32, #tpu.memory_space<vmem>>, vector<8x128xf32>,
    return
  }
  func.func @transform_0(%arg0: i32) -> (i32, i32) {
    %c0_i32 = arith.constant 0 : i32
    %c0_i32_0 = arith.constant 0 : i32
    return %arg0, %c0_i32 : i32, i32
  }
  func.func @transform_1(%arg0: i32) -> (i32, i32) {
    %c0_i32 = arith.constant 0 : i32
    %c0_i32_0 = arith.constant 0 : i32
    %c0_i32_1 = arith.constant 0 : i32
    return %c0_i32, %c0_i32_0 : i32, i32
  }
  func.func @transform_2(%arg0: i32) -> (i32, i32) {
    %c0_i32 = arith.constant 0 : i32
    %c0_i32_0 = arith.constant 0 : i32
    %c0_i32_1 = arith.constant 0 : i32
    return %c0_i32, %c0_i32_0 : i32, i32
  }
  func.func @transform_3(%arg0: i32) -> (i32, i32) {
    %c0_i32 = arith.constant 0 : i32
    %c0_i32_0 = arith.constant 0 : i32
    %c0_i32_1 = arith.constant 0 : i32
    return %c0_i32, %c0_i32_0 : i32, i32
  }
  func.func @transform_4(%arg0: i32) -> (i32, i32) {
    %c0_i32 = arith.constant 0 : i32
    %c0_i32_0 = arith.constant 0 : i32
    %c0_i32_1 = arith.constant 0 : i32
    return %c0_i32, %c0_i32_0 : i32, i32
  }
  func.func @transform_5(%arg0: i32) -> (i32, i32) {
    %c0_i32 = arith.constant 0 : i32
    %c0_i32_0 = arith.constant 0 : i32
    return %arg0, %c0_i32 : i32, i32
  }
}

module attributes {stable_mosaic.version = 11 : i64} {
  func.func @_ffn_resident_kernel(%arg0: i32, %arg1: memref<8x32xbf16, #tpu.memory_space<vmem>>, %arg2: memref<64x32xbf16, #tpu.memory_space<vmem>>, %arg3: memref<1x64xf32, #tpu.memory_space<vmem>>, %arg4: memref<128x64xbf16, #tpu.memory_space<vmem>>, %arg5: memref<1x128xf32, #tpu.memory_space<vmem>>, %arg6: memref<8x128xf32, #tpu.memory_space<vmem>>) attributes {dimension_semantics = [#tpu.dimension_semantics<parallel>], iteration_bounds = array<i64: 2>, scalar_prefetch = 0 : i64, scratch_operands = 0 : i64, tpu.core_type = #tpu.core_type<tc>, window_params = [{transform_indices = @transform_0, window_bounds = array<i64: 8, 32>}, {pipeline_mode = #tpu.pipeline_mode<synchronous>, transform_indices = @transform_1, window_bounds = array<i64: 64, 32>}, {pipeline_mode = #tpu.pipeline_mode<synchronous>, transform_indices = @transform_2, window_bounds = array<i64: 1, 64>}, {pipeline_mode = #tpu.pipeline_mode<synchronous>, transform_indices = @transform_3, window_bounds = array<i64: 128, 64>}, {pipeline_mode = #tpu.pipeline_mode<synchronous>, transform_indices = @transform_4, window_bounds = array<i64: 1, 128>}, {transform_indices = @transform_5, window_bounds = array<i64: 8, 128>}]} {
    %c0 = arith.constant 0 : index
    %c0_0 = arith.constant 0 : index
    %0 = vector.load %arg1[%c0, %c0_0] : memref<8x32xbf16, #tpu.memory_space<vmem>>, vector<8x32xbf16>
    %c0_1 = arith.constant 0 : index
    %c0_2 = arith.constant 0 : index
    %1 = vector.load %arg2[%c0_1, %c0_2] : memref<64x32xbf16, #tpu.memory_space<vmem>>, vector<64x32xbf16>
    %cst = arith.constant dense<0.000000e+00> : vector<8x64xf32>
    %2 = tpu.matmul %0, %1, %cst {dimension_numbers = #tpu.dot_dimension_numbers<[1], [1], [0], [0], [0, 0, 1, 0], [], []>} : vector<8x32xbf16>, vector<64x32xbf16>, vector<8x64xf32> -> vector<8x64xf32>
    %c0_3 = arith.constant 0 : index
    %c0_4 = arith.constant 0 : index
    %3 = vector.load %arg3[%c0_3, %c0_4] : memref<1x64xf32, #tpu.memory_space<vmem>>, vector<1x64xf32>
    %4 = vector.broadcast %3 : vector<1x64xf32> to vector<8x64xf32>
    %5 = arith.addf %2, %4 : vector<8x64xf32>
    %cst_5 = arith.constant 0.000000e+00 : f32
    %6 = vector.broadcast %cst_5 : f32 to vector<8x64xf32>
    %7 = arith.maximumf %5, %6 : vector<8x64xf32>
    %8 = arith.truncf %7 : vector<8x64xf32> to vector<8x64xbf16>
    %c0_6 = arith.constant 0 : index
    %c0_7 = arith.constant 0 : index
    %9 = vector.load %arg4[%c0_6, %c0_7] : memref<128x64xbf16, #tpu.memory_space<vmem>>, vector<128x64xbf16>
    %cst_8 = arith.constant dense<0.000000e+00> : vector<8x128xf32>
    %10 = tpu.matmul %8, %9, %cst_8 {dimension_numbers = #tpu.dot_dimension_numbers<[1], [1], [0], [0], [0, 0, 1, 0], [], []>} : vector<8x64xbf16>, vector<128x64xbf16>, vector<8x128xf32> -> vector<8x128xf32>
    %c0_9 = arith.constant 0 : index
    %c0_10 = arith.constant 0 : index
    %11 = vector.load %arg5[%c0_9, %c0_10] : memref<1x128xf32, #tpu.memory_space<vmem>>, vector<1x128xf32>
    %12 = vector.broadcast %11 : vector<1x128xf32> to vector<8x128xf32>
    %13 = arith.addf %10, %12 : vector<8x128xf32>
    %c0_11 = arith.constant 0 : index
    %c0_12 = arith.constant 0 : index
    %14 = vector.load %arg6[%c0_11, %c0_12] : memref<8x128xf32, #tpu.memory_space<vmem>>, vector<8x128xf32>
    tpu.vector_store %arg6[%c0_11, %c0_12], %13 {strides = array<i32>} : memref<8x128xf32, #tpu.memory_space<vmem>>, vector<8x128xf32>,
    return
  }
  func.func @transform_0(%arg0: i32) -> (i32, i32) {
    %c0_i32 = arith.constant 0 : i32
    %c0_i32_0 = arith.constant 0 : i32
    return %arg0, %c0_i32 : i32, i32
  }
  func.func @transform_1(%arg0: i32) -> (i32, i32) {
    %c0_i32 = arith.constant 0 : i32
    %c0_i32_0 = arith.constant 0 : i32
    %c0_i32_1 = arith.constant 0 : i32
    return %c0_i32, %c0_i32_0 : i32, i32
  }
  func.func @transform_2(%arg0: i32) -> (i32, i32) {
    %c0_i32 = arith.constant 0 : i32
    %c0_i32_0 = arith.constant 0 : i32
    %c0_i32_1 = arith.constant 0 : i32
    return %c0_i32, %c0_i32_0 : i32, i32
  }
  func.func @transform_3(%arg0: i32) -> (i32, i32) {
    %c0_i32 = arith.constant 0 : i32
    %c0_i32_0 = arith.constant 0 : i32
    %c0_i32_1 = arith.constant 0 : i32
    return %c0_i32, %c0_i32_0 : i32, i32
  }
  func.func @transform_4(%arg0: i32) -> (i32, i32) {
    %c0_i32 = arith.constant 0 : i32
    %c0_i32_0 = arith.constant 0 : i32
    %c0_i32_1 = arith.constant 0 : i32
    return %c0_i32, %c0_i32_0 : i32, i32
  }
  func.func @transform_5(%arg0: i32) -> (i32, i32) {
    %c0_i32 = arith.constant 0 : i32
    %c0_i32_0 = arith.constant 0 : i32
    return %arg0, %c0_i32 : i32, i32
  }
}

</mosaic_0001>

<llo_original>
// kernel: tpu_custom_call.1
$region0: #{tpu_custom_call.1}
  #allocation0 [shape = 'u32[]', space=smem, size = 0x4, offset = 0x4, fixed_abs, tag = 'smem constant byte address 0x4 - core index']
  #allocation1 [shape = 'u32[72,128]{1,0:T(1,128)}', space=vmem, size = 0x9000, scoped, tag = 'internal scratch']
  %s0 = inlined_call_operand.vmem [shape: bf16[16,32], index: 0, kind: input, shape index: {}]
  %s1 = inlined_call_operand.vmem [shape: bf16[64,32], index: 1, kind: input, shape index: {}]
  %s2 = inlined_call_operand.vmem [shape: f32[1,64], index: 2, kind: input, shape index: {}]
  %s3 = inlined_call_operand.vmem [shape: bf16[128,64], index: 3, kind: input, shape index: {}]
  %s4 = inlined_call_operand.vmem [shape: f32[1,128], index: 4, kind: input, shape index: {}]
  %s5 = inlined_call_operand.hbm [shape: f32[16,128], index: 5, kind: output, shape index: {}]
  %s6 = sld [smem:[#allocation0]]
  $region53: #{tpu_custom_call.1} parent=0
    _
  %s8 = ssub.s32 1, %s6
  %s9 = scalar_select 0, %s8, %s6
  $region1: #{tpu_custom_call.1} parent=0
    #allocation2 [shape = 'u8[8192]{0}', space=vmem, size = 0x2000, scoped, tag = 'output window, operand 0']
    #allocation3 [shape = 's32[2]{0}', space=sflag, size = 0x8, scoped, tag = 'scoped memory for tpu_custom_call.1']
    %10 = vsyncpa [#allocation3], 0
    %s11 = scalar_lea.sflag [#allocation3], 1
    %12 = vsyncpa %s11, 0
    loop: start=0, step=1, limit=4
    $region2: #{tpu_custom_call.1} parent=1 // loop_pre_header
      _
    $region3: #{tpu_custom_call.1} parent=1 // loop_header
      %s14 = sphi 0, %s18
      %p15 = scmp.ge.s32.totalorder %s14, 4
      %s24 = sphi 0, %s26
      %s27 = sphi 0, %s24
      %s28 = sphi 0, %s27
      %s44 = sphi 0, %s28
      %s48 = sphi 0, %s48
      %s50 = sphi 0, %s48
      %s51 = sphi 0, %s50
      %s65 = sphi 0, %s51
      %s69 = sphi 0, %s69
      %s71 = sphi 0, %s69
      %s72 = sphi 0, %s71
      %s86 = sphi 0, %s72
      %s90 = sphi 0, %s90
      %s92 = sphi 0, %s90
      %s93 = sphi 0, %s92
      %s107 = sphi 0, %s93
      %s111 = sphi 0, %s111
      %s113 = sphi 0, %s111
      %s114 = sphi 0, %s113
      %s128 = sphi 0, %s114
      %s134 = sphi 0, %s136
      %s137 = sphi 0, %s134
      %s138 = sphi 0, %s137
      %s154 = sphi 0, %s138
    $region4: #{tpu_custom_call.1} parent=1 // loop_header_branch
      %17 = sbr.rel (%p15) target = $region8
    $region5: #{tpu_custom_call.1} parent=1 // loop_body
      %s19 = ssub.s32 %s14, 1
      %s20 = ssub.s32 %s14, 2
      %s21 = sadd.s32 %s14, 1
      %s22 = ssub.s32 %s14, %s21
      %p23 = scmp.eq.s32.totalorder %s22, 0
      %s25 = sadd.s32 %s24, 1
      %s26 = scalar_select %p23, %s24, %s25
      %p29 = pneg %p23
      %p30 = scmp.eq.s32.totalorder %s14, 1
      %p31 = por %p29, %p30
      %p32 = scmp.ne.s32.totalorder %s24, %s27
      %p33 = scmp.eq.s32.totalorder %s14, 0
      %p34 = por %p32, %p33
      %p35 = scmp.ne.s32.totalorder %s24, %s27
      %p36 = scmp.eq.s32.totalorder %s19, 1
      %p37 = por %p35, %p36
      %p38 = scmp.ne.s32.totalorder %s27, %s28
      %p39 = scmp.eq.s32.totalorder %s19, 0
      %p40 = por %p38, %p39
      %p41 = scmp.ne.s32.totalorder %s27, %s28
      %p42 = scmp.eq.s32.totalorder %s20, 1
      %p43 = por %p41, %p42
      %p45 = scmp.ne.s32.totalorder %s28, %s44
      %p46 = scmp.eq.s32.totalorder %s20, 0
      %p47 = por %p45, %p46
      %s49 = sadd.s32 %s48, 1
      %p52 = scmp.eq.s32.totalorder %s14, 1
      %p53 = scmp.ne.s32.totalorder %s48, %s50
      %p54 = scmp.eq.s32.totalorder %s14, 0
      %p55 = por %p53, %p54
      %p56 = scmp.ne.s32.totalorder %s48, %s50
      %p57 = scmp.eq.s32.totalorder %s19, 1
      %p58 = por %p56, %p57
      %p59 = scmp.ne.s32.totalorder %s50, %s51
      %p60 = scmp.eq.s32.totalorder %s19, 0
      %p61 = por %p59, %p60
      %p62 = scmp.ne.s32.totalorder %s50, %s51
      %p63 = scmp.eq.s32.totalorder %s20, 1
      %p64 = por %p62, %p63
      %p66 = scmp.ne.s32.totalorder %s51, %s65
      %p67 = scmp.eq.s32.totalorder %s20, 0
      %p68 = por %p66, %p67
      %s70 = sadd.s32 %s69, 1
      %p73 = scmp.eq.s32.totalorder %s14, 1
      %p74 = scmp.ne.s32.totalorder %s69, %s71
      %p75 = scmp.eq.s32.totalorder %s14, 0
      %p76 = por %p74, %p75
      %p77 = scmp.ne.s32.totalorder %s69, %s71
      %p78 = scmp.eq.s32.totalorder %s19, 1
      %p79 = por %p77, %p78
      %p80 = scmp.ne.s32.totalorder %s71, %s72
      %p81 = scmp.eq.s32.totalorder %s19, 0
      %p82 = por %p80, %p81
      %p83 = scmp.ne.s32.totalorder %s71, %s72
      %p84 = scmp.eq.s32.totalorder %s20, 1
      %p85 = por %p83, %p84
      %p87 = scmp.ne.s32.totalorder %s72, %s86
      %p88 = scmp.eq.s32.totalorder %s20, 0
      %p89 = por %p87, %p88
      %s91 = sadd.s32 %s90, 1
      %p94 = scmp.eq.s32.totalorder %s14, 1
      %p95 = scmp.ne.s32.totalorder %s90, %s92
      %p96 = scmp.eq.s32.totalorder %s14, 0
      %p97 = por %p95, %p96
      %p98 = scmp.ne.s32.totalorder %s90, %s92
      %p99 = scmp.eq.s32.totalorder %s19, 1
      %p100 = por %p98, %p99
      %p101 = scmp.ne.s32.totalorder %s92, %s93
      %p102 = scmp.eq.s32.totalorder %s19, 0
      %p103 = por %p101, %p102
      %p104 = scmp.ne.s32.totalorder %s92, %s93
      %p105 = scmp.eq.s32.totalorder %s20, 1
      %p106 = por %p104, %p105
      %p108 = scmp.ne.s32.totalorder %s93, %s107
      %p109 = scmp.eq.s32.totalorder %s20, 0
      %p110 = por %p108, %p109
      %s112 = sadd.s32 %s111, 1
      %p115 = scmp.eq.s32.totalorder %s14, 1
      %p116 = scmp.ne.s32.totalorder %s111, %s113
      %p117 = scmp.eq.s32.totalorder %s14, 0
      %p118 = por %p116, %p117
      %p119 = scmp.ne.s32.totalorder %s111, %s113
      %p120 = scmp.eq.s32.totalorder %s19, 1
      %p121 = por %p119, %p120
      %p122 = scmp.ne.s32.totalorder %s113, %s114
      %p123 = scmp.eq.s32.totalorder %s19, 0
      %p124 = por %p122, %p123
      %p125 = scmp.ne.s32.totalorder %s113, %s114
      %p126 = scmp.eq.s32.totalorder %s20, 1
      %p127 = por %p125, %p126
      %p129 = scmp.ne.s32.totalorder %s114, %s128
      %p130 = scmp.eq.s32.totalorder %s20, 0
      %p131 = por %p129, %p130
      %s132 = ssub.s32 %s14, %s21
      %p133 = scmp.eq.s32.totalorder %s132, 0
      %s135 = sadd.s32 %s134, 1
      %s136 = scalar_select %p133, %s134, %s135
      %p139 = pneg %p133
      %p140 = scmp.eq.s32.totalorder %s14, 1
      %p141 = por %p139, %p140
      %p142 = scmp.ne.s32.totalorder %s134, %s137
      %p143 = scmp.eq.s32.totalorder %s14, 0
      %p144 = por %p142, %p143
      %p145 = scmp.ne.s32.totalorder %s134, %s137
      %p146 = scmp.eq.s32.totalorder %s19, 1
      %p147 = por %p145, %p146
      %p148 = scmp.ne.s32.totalorder %s137, %s138
      %p149 = scmp.eq.s32.totalorder %s19, 0
      %p150 = por %p148, %p149
      %p151 = scmp.ne.s32.totalorder %s137, %s138
      %p152 = scmp.eq.s32.totalorder %s20, 1
      %p153 = por %p151, %p152
      %p155 = scmp.ne.s32.totalorder %s138, %s154
      %p156 = scmp.eq.s32.totalorder %s20, 0
      %p157 = por %p155, %p156
      %p158 = scmp.le.s32.totalorder 1, %s14
      %p159 = scmp.lt.s32.totalorder %s14, 3
      %p160 = pnand %p158, %p159
      %p161 = pneg %p160
      // Predicated region
      $region9: #{tpu_custom_call.1} parent=5 // pred_check
        _
      $region10: #{tpu_custom_call.1} parent=5 // pred_check_branch
        %163 = sbr.rel (%p160) target = $region12
      $region11: #{tpu_custom_call.1} parent=5 // pred_region
        %s164 = ssub.s32 %s14, 1
        // Predicated region
        $region13: #{tpu_custom_call.1} parent=11 // pred_check
          %p165 = pneg %p61
        $region14: #{tpu_custom_call.1} parent=11 // pred_check_branch
          %167 = sbr.rel (%p165) target = $region16
        $region15: #{tpu_custom_call.1} parent=11 // pred_region
          _
        $region16: #{tpu_custom_call.1} parent=11 // pred_fallthru
          _
        // Predicated region
        $region17: #{tpu_custom_call.1} parent=11 // pred_check
          %p168 = pneg %p82
        $region18: #{tpu_custom_call.1} parent=11 // pred_check_branch
          %170 = sbr.rel (%p168) target = $region20
        $region19: #{tpu_custom_call.1} parent=11 // pred_region
          _
        $region20: #{tpu_custom_call.1} parent=11 // pred_fallthru
          _
        // Predicated region
        $region21: #{tpu_custom_call.1} parent=11 // pred_check
          %p171 = pneg %p103
        $region22: #{tpu_custom_call.1} parent=11 // pred_check_branch
          %173 = sbr.rel (%p171) target = $region24
        $region23: #{tpu_custom_call.1} parent=11 // pred_region
          _
        $region24: #{tpu_custom_call.1} parent=11 // pred_fallthru
          _
        // Predicated region
        $region25: #{tpu_custom_call.1} parent=11 // pred_check
          %p174 = pneg %p124
        $region26: #{tpu_custom_call.1} parent=11 // pred_check_branch
          %176 = sbr.rel (%p174) target = $region28
        $region27: #{tpu_custom_call.1} parent=11 // pred_region
          _
        $region28: #{tpu_custom_call.1} parent=11 // pred_fallthru
          _
      $region12: #{tpu_custom_call.1} parent=5 // pred_fallthru
        _
      %p177 = scmp.lt.s32.totalorder %s14, 2
      // Predicated region
      $region29: #{tpu_custom_call.1} parent=5 // pred_check
        %p178 = pneg %p177
      $region30: #{tpu_custom_call.1} parent=5 // pred_check_branch
        %180 = sbr.rel (%p178) target = $region32
      $region31: #{tpu_custom_call.1} parent=5 // pred_region
        // Predicated region
        $region33: #{tpu_custom_call.1} parent=31 // pred_check
          %p181 = pneg %p34
        $region34: #{tpu_custom_call.1} parent=31 // pred_check_branch
          %183 = sbr.rel (%p181) target = $region36
        $region35: #{tpu_custom_call.1} parent=31 // pred_region
          %p184 = scmp.lt.s32.totalorder %s14, 1
          %s185 = scalar_select %p184, %s14, 1
          %s186 = smul.addr %s185, 4
          %s187 = scalar_lea.vmem %s0, %s186
        $region36: #{tpu_custom_call.1} parent=31 // pred_fallthru
          _
      $region32: #{tpu_custom_call.1} parent=5 // pred_fallthru
        _
      %p188 = scmp.le.s32.totalorder 1, %s14
      %p189 = scmp.lt.s32.totalorder %s14, 3
      %p190 = pnand %p188, %p189
      %p191 = pneg %p190
      // Predicated region
      $region37: #{tpu_custom_call.1} parent=5 // pred_check
        _
      $region38: #{tpu_custom_call.1} parent=5 // pred_check_branch
        %193 = sbr.rel (%p190) target = $region40
      $region39: #{tpu_custom_call.1} parent=5 // pred_region
        %s194 = ssub.s32 %s14, 1
        %p195 = scmp.lt.s32.totalorder %s19, 1
        %s196 = scalar_select %p195, %s19, 1
        %s197 = smul.addr %s196, 4
        %s198 = scalar_lea.vmem %s0, %s197
        %p199 = pneg %p40
        %p200 = pneg %p37
        %p201 = pneg %p61
        %p202 = pneg %p58
        %p203 = pneg %p82
        %p204 = pneg %p79
        %p205 = pneg %p103
        %p206 = pneg %p100
        %p207 = pneg %p124
        %p208 = pneg %p121
        %p209 = pneg %p150
        %p210 = pneg %p147
        %s211 = sand.u32 %s137, 1
        %s212 = scalar_lea.sflag [#allocation3], %s211
        %s213 = sand.u32 %s137, 1
        %s214 = smul.addr %s213, 8
        %s215 = scalar_lea.vmem [#allocation2], %s214
        %p216 = scmp.lt.s32.totalorder %s19, 1
        %s217 = scalar_select %p216, %s19, 1
        %s218 = smul.addr %s217, 4
        %s219 = scalar_lea.vmem %s0, %s218
        %v221 = vld [vmem:[%s219] sm:$0xf]
        %v222 = vld [vmem:[%s1] sm:$0xf]
        %v223 = vld [vmem:[%s1 + $0x4] sm:$0xf]
        %v224 = vld [vmem:[%s1 + $0x8] sm:$0xf]
        %v225 = vld [vmem:[%s1 + $0xc] sm:$0xf]
        %v226 = vld [vmem:[%s1 + $0x10] sm:$0xf]
        %v227 = vld [vmem:[%s1 + $0x14] sm:$0xf]
        %v228 = vld [vmem:[%s1 + $0x18] sm:$0xf]
        %v229 = vld [vmem:[%s1 + $0x1c] sm:$0xf]
        %v230 = vld [vmem:[%s2] sm:$0x1]
        %v232 = vperm.slane %v230, 0
        %v242 = vunpack.c.l.b16 %v222
        %v243 = vunpack.c.l.b16 %v223
        %v244 = vunpack.c.l.b16 %v224
        %v245 = vunpack.c.l.b16 %v225
        %v246 = vunpack.c.l.b16 %v226
        %v247 = vunpack.c.l.b16 %v227
        %v248 = vunpack.c.l.b16 %v228
        %v249 = vunpack.c.l.b16 %v229
        %v250 = vpack.c.b16 %v243, %v242
        %v251 = vpack.c.b16 %v245, %v244
        %v252 = vpack.c.b16 %v247, %v246
        %v253 = vpack.c.b16 %v249, %v248
        %vm254 = vcmask 261120
        %v256 = vsel %vm254, %v221, 0
        %v259 = vsel %vm254, %v250, 0
        %v262 = vsel %vm254, %v251, 0
        %v265 = vsel %vm254, %v252, 0
        %v268 = vsel %vm254, %v253, 0
        %270 = vmatpush.bf16.xpose.msra.mxu0 0
        %271 = vmatpush.bf16.xpose.msra.mxu0 0
        %272 = vmatpush.bf16.xpose.msra.mxu0 0
        %273 = vmatpush.bf16.xpose.msra.mxu0 0
        %274 = vmatpush.bf16.xpose.msra.mxu0 %v268
        %275 = vmatpush.bf16.xpose.msra.mxu0 %v265
        %276 = vmatpush.bf16.xpose.msra.mxu0 %v262
        %277 = vmatpush.bf16.xpose.msra.mxu0 %v259
        %278 = vmatmul.bf16.gmra.mxu0 %v256
        %v279 = vpop.f32.mrf.mxu0
        %v280 = vadd.f32 %v232, %v279
        %v281 = vpop.f32.mrf.mxu0
        %282 = vdwg.mxu0
        %v283 = vmax.f32 %v280, 0.0
        %v284 = vpack.c.bf16 %v283, %v283
        %v285 = vld [vmem:[%s3] sm:$0xf]
        %v286 = vld [vmem:[%s3 + $0x4] sm:$0xf]
        %v287 = vld [vmem:[%s3 + $0x8] sm:$0xf]
        %v288 = vld [vmem:[%s3 + $0xc] sm:$0xf]
        %v289 = vld [vmem:[%s3 + $0x10] sm:$0xf]
        %v290 = vld [vmem:[%s3 + $0x14] sm:$0xf]
        %v291 = vld [vmem:[%s3 + $0x18] sm:$0xf]
        %v292 = vld [vmem:[%s3 + $0x1c] sm:$0xf]
        %v293 = vld [vmem:[%s3 + $0x20] sm:$0xf]
        %v294 = vld [vmem:[%s3 + $0x24] sm:$0xf]
        %v295 = vld [vmem:[%s3 + $0x28] sm:$0xf]
        %v296 = vld [vmem:[%s3 + $0x2c] sm:$0xf]
        %v297 = vld [vmem:[%s3 + $0x30] sm:$0xf]
        %v298 = vld [vmem:[%s3 + $0x34] sm:$0xf]
        %v299 = vld [vmem:[%s3 + $0x38] sm:$0xf]
        %v300 = vld [vmem:[%s3 + $0x3c] sm:$0xf]
        %v301 = vld [vmem:[%s4] sm:$0x1]
        %v303 = vperm.slane %v301, 0
        %v321 = vunpack.c.l.b16 %v285
        %v322 = vunpack.c.l.b16 %v286
        %v323 = vunpack.c.l.b16 %v287
        %v324 = vunpack.c.l.b16 %v288
        %v325 = vunpack.c.l.b16 %v289
        %v326 = vunpack.c.l.b16 %v290
        %v327 = vunpack.c.l.b16 %v291
        %v328 = vunpack.c.l.b16 %v292
        %v329 = vunpack.c.l.b16 %v293
        %v330 = vunpack.c.l.b16 %v294
        %v331 = vunpack.c.l.b16 %v295
        %v332 = vunpack.c.l.b16 %v296
        %v333 = vunpack.c.l.b16 %v297
        %v334 = vunpack.c.l.b16 %v298
        %v335 = vunpack.c.l.b16 %v299
        %v336 = vunpack.c.l.b16 %v300
        %v337 = vpack.c.b16 %v322, %v321
        %v338 = vpack.c.b16 %v324, %v323
        %v339 = vpack.c.b16 %v326, %v325
        %v340 = vpack.c.b16 %v328, %v327
        %v341 = vpack.c.b16 %v330, %v329
        %v342 = vpack.c.b16 %v332, %v331
        %v343 = vpack.c.b16 %v334, %v333
        %v344 = vpack.c.b16 %v336, %v335
        %vm345 = vcmask 523264
        %v347 = vsel %vm345, %v284, 0
        %v350 = vsel %vm345, %v337, 0
        %v353 = vsel %vm345, %v338, 0
        %v356 = vsel %vm345, %v339, 0
        %v359 = vsel %vm345, %v340, 0
        %v362 = vsel %vm345, %v341, 0
        %v365 = vsel %vm345, %v342, 0
        %v368 = vsel %vm345, %v343, 0
        %v371 = vsel %vm345, %v344, 0
        %373 = vmatpush.bf16.xpose.msra.mxu0 %v371
        %374 = vmatpush.bf16.xpose.msra.mxu0 %v368
        %375 = vmatpush.bf16.xpose.msra.mxu0 %v365
        %376 = vmatpush.bf16.xpose.msra.mxu0 %v362
        %377 = vmatpush.bf16.xpose.msra.mxu0 %v359
        %378 = vmatpush.bf16.xpose.msra.mxu0 %v356
        %379 = vmatpush.bf16.xpose.msra.mxu0 %v353
        %380 = vmatpush.bf16.xpose.msra.mxu0 %v350
        %381 = vmatmul.bf16.gmra.mxu0 %v347
        %v382 = vpop.f32.mrf.mxu0
        %v383 = vadd.f32 %v303, %v382
        %v384 = vpop.f32.mrf.mxu0
        %385 = vdwg.mxu0
        %386 = vst [vmem:[%s215] sm:$0xff] %v383
        %s387 = sand.u32 %s137, 1
        %s388 = scalar_lea.sflag [#allocation3], %s387
        %s389 = sand.u32 %s137, 1
        %s390 = smul.addr %s389, 8
        %s391 = scalar_lea.vmem [#allocation2], %s390
        // Predicated region
        $region41: #{tpu_custom_call.1} parent=39 // pred_check
          %p392 = pneg %p147
        $region42: #{tpu_custom_call.1} parent=39 // pred_check_branch
          %394 = sbr.rel (%p392) target = $region44
        $region43: #{tpu_custom_call.1} parent=39 // pred_region
          %396 = vsyncadd %s388, 0
          %s397 = smul.addr %s19, 8
          %s398 = scalar_lea.hbm %s5, %s397
          %s400 = sshll.u32 %s391, 4
          %s401 = int_to_ptr.vmem [resolvable:$true] %s400
          %s402 = sshll.u32 %s398, 4
          %s403 = int_to_ptr.hbm [resolvable:$true] %s402
          %405 = dma.vmem_to_hbm [thread:$0]  %s401, 128, %s403, %s388
        $region44: #{tpu_custom_call.1} parent=39 // pred_fallthru
          _
      $region40: #{tpu_custom_call.1} parent=5 // pred_fallthru
        _
      %p406 = scmp.le.s32.totalorder 2, %s14
      // Predicated region
      $region45: #{tpu_custom_call.1} parent=5 // pred_check
        %p407 = pneg %p406
      $region46: #{tpu_custom_call.1} parent=5 // pred_check_branch
        %409 = sbr.rel (%p407) target = $region48
      $region47: #{tpu_custom_call.1} parent=5 // pred_region
        %s410 = ssub.s32 %s14, 2
        // Predicated region
        $region49: #{tpu_custom_call.1} parent=47 // pred_check
          %p411 = pneg %p153
        $region50: #{tpu_custom_call.1} parent=47 // pred_check_branch
          %413 = sbr.rel (%p411) target = $region52
        $region51: #{tpu_custom_call.1} parent=47 // pred_region
          %s414 = sand.u32 %s138, 1
          %s415 = scalar_lea.sflag [#allocation3], %s414
          %s416 = sand.u32 %s138, 1
          %s417 = smul.addr %s416, 8
          %s418 = scalar_lea.vmem [#allocation2], %s417
          %420 = dma.done %s415, 128
        $region52: #{tpu_custom_call.1} parent=47 // pred_fallthru
          _
      $region48: #{tpu_custom_call.1} parent=5 // pred_fallthru
        _
    $region6: #{tpu_custom_call.1} parent=1 // loop_footer
      %s18 = sadd.s32 1, %s14
    $region7: #{tpu_custom_call.1} parent=1 // loop_footer_branch
      %13 = sbr.rel target = $region3
    $region8: #{tpu_custom_call.1} parent=1 // loop_exit
      _
    %421 = vsyncpa [#allocation3], 1
    %s422 = scalar_lea.sflag [#allocation3], 1
    %423 = vsyncpa %s422, 1

// kernel: tpu_custom_call.1
$region0: #{tpu_custom_call.1}
  #allocation0 [shape = 'u32[]', space=smem, size = 0x4, offset = 0x4, fixed_abs, tag = 'smem constant byte address 0x4 - core index']
  #allocation1 [shape = 'u32[72,128]{1,0:T(1,128)}', space=vmem, size = 0x9000, scoped, tag = 'internal scratch']
  %s0 = inlined_call_operand.vmem [shape: bf16[16,32], index: 0, kind: input, shape index: {}]
  %s1 = inlined_call_operand.vmem [shape: bf16[64,32], index: 1, kind: input, shape index: {}]
  %s2 = inlined_call_operand.vmem [shape: f32[1,64], index: 2, kind: input, shape index: {}]
  %s3 = inlined_call_operand.vmem [shape: bf16[128,64], index: 3, kind: input, shape index: {}]
  %s4 = inlined_call_operand.vmem [shape: f32[1,128], index: 4, kind: input, shape index: {}]
  %s5 = inlined_call_operand.hbm [shape: f32[16,128], index: 5, kind: output, shape index: {}]
  %s6 = sld [smem:[#allocation0]]
  $region53: #{tpu_custom_call.1} parent=0
    _
  %s8 = ssub.s32 1, %s6
  %s9 = scalar_select 0, %s8, %s6
  $region1: #{tpu_custom_call.1} parent=0
    #allocation2 [shape = 'u8[8192]{0}', space=vmem, size = 0x2000, scoped, tag = 'output window, operand 0']
    #allocation3 [shape = 's32[2]{0}', space=sflag, size = 0x8, scoped, tag = 'scoped memory for tpu_custom_call.1']
    %10 = vsyncpa [#allocation3], 0
    %s11 = scalar_lea.sflag [#allocation3], 1
    %12 = vsyncpa %s11, 0
    loop: start=0, step=1, limit=4
    $region2: #{tpu_custom_call.1} parent=1 // loop_pre_header
      _
    $region3: #{tpu_custom_call.1} parent=1 // loop_header
      %s14 = sphi 0, %s18
      %p15 = scmp.ge.s32.totalorder %s14, 4
      %s24 = sphi 0, %s26
      %s27 = sphi 0, %s24
      %s28 = sphi 0, %s27
      %s44 = sphi 0, %s28
      %s48 = sphi 0, %s48
      %s50 = sphi 0, %s48
      %s51 = sphi 0, %s50
      %s65 = sphi 0, %s51
      %s69 = sphi 0, %s69
      %s71 = sphi 0, %s69
      %s72 = sphi 0, %s71
      %s86 = sphi 0, %s72
      %s90 = sphi 0, %s90
      %s92 = sphi 0, %s90
      %s93 = sphi 0, %s92
      %s107 = sphi 0, %s93
      %s111 = sphi 0, %s111
      %s113 = sphi 0, %s111
      %s114 = sphi 0, %s113
      %s128 = sphi 0, %s114
      %s134 = sphi 0, %s136
      %s137 = sphi 0, %s134
      %s138 = sphi 0, %s137
      %s154 = sphi 0, %s138
    $region4: #{tpu_custom_call.1} parent=1 // loop_header_branch
      %17 = sbr.rel (%p15) target = $region8
    $region5: #{tpu_custom_call.1} parent=1 // loop_body
      %s19 = ssub.s32 %s14, 1
      %s20 = ssub.s32 %s14, 2
      %s21 = sadd.s32 %s14, 1
      %s22 = ssub.s32 %s14, %s21
      %p23 = scmp.eq.s32.totalorder %s22, 0
      %s25 = sadd.s32 %s24, 1
      %s26 = scalar_select %p23, %s24, %s25
      %p29 = pneg %p23
      %p30 = scmp.eq.s32.totalorder %s14, 1
      %p31 = por %p29, %p30
      %p32 = scmp.ne.s32.totalorder %s24, %s27
      %p33 = scmp.eq.s32.totalorder %s14, 0
      %p34 = por %p32, %p33
      %p35 = scmp.ne.s32.totalorder %s24, %s27
      %p36 = scmp.eq.s32.totalorder %s19, 1
      %p37 = por %p35, %p36
      %p38 = scmp.ne.s32.totalorder %s27, %s28
      %p39 = scmp.eq.s32.totalorder %s19, 0
      %p40 = por %p38, %p39
      %p41 = scmp.ne.s32.totalorder %s27, %s28
      %p42 = scmp.eq.s32.totalorder %s20, 1
      %p43 = por %p41, %p42
      %p45 = scmp.ne.s32.totalorder %s28, %s44
      %p46 = scmp.eq.s32.totalorder %s20, 0
      %p47 = por %p45, %p46
      %s49 = sadd.s32 %s48, 1
      %p52 = scmp.eq.s32.totalorder %s14, 1
      %p53 = scmp.ne.s32.totalorder %s48, %s50
      %p54 = scmp.eq.s32.totalorder %s14, 0
      %p55 = por %p53, %p54
      %p56 = scmp.ne.s32.totalorder %s48, %s50
      %p57 = scmp.eq.s32.totalorder %s19, 1
      %p58 = por %p56, %p57
      %p59 = scmp.ne.s32.totalorder %s50, %s51
      %p60 = scmp.eq.s32.totalorder %s19, 0
      %p61 = por %p59, %p60
      %p62 = scmp.ne.s32.totalorder %s50, %s51
      %p63 = scmp.eq.s32.totalorder %s20, 1
      %p64 = por %p62, %p63
      %p66 = scmp.ne.s32.totalorder %s51, %s65
      %p67 = scmp.eq.s32.totalorder %s20, 0
      %p68 = por %p66, %p67
      %s70 = sadd.s32 %s69, 1
      %p73 = scmp.eq.s32.totalorder %s14, 1
      %p74 = scmp.ne.s32.totalorder %s69, %s71
      %p75 = scmp.eq.s32.totalorder %s14, 0
      %p76 = por %p74, %p75
      %p77 = scmp.ne.s32.totalorder %s69, %s71
      %p78 = scmp.eq.s32.totalorder %s19, 1
      %p79 = por %p77, %p78
      %p80 = scmp.ne.s32.totalorder %s71, %s72
      %p81 = scmp.eq.s32.totalorder %s19, 0
      %p82 = por %p80, %p81
      %p83 = scmp.ne.s32.totalorder %s71, %s72
      %p84 = scmp.eq.s32.totalorder %s20, 1
      %p85 = por %p83, %p84
      %p87 = scmp.ne.s32.totalorder %s72, %s86
      %p88 = scmp.eq.s32.totalorder %s20, 0
      %p89 = por %p87, %p88
      %s91 = sadd.s32 %s90, 1
      %p94 = scmp.eq.s32.totalorder %s14, 1
      %p95 = scmp.ne.s32.totalorder %s90, %s92
      %p96 = scmp.eq.s32.totalorder %s14, 0
      %p97 = por %p95, %p96
      %p98 = scmp.ne.s32.totalorder %s90, %s92
      %p99 = scmp.eq.s32.totalorder %s19, 1
      %p100 = por %p98, %p99
      %p101 = scmp.ne.s32.totalorder %s92, %s93
      %p102 = scmp.eq.s32.totalorder %s19, 0
      %p103 = por %p101, %p102
      %p104 = scmp.ne.s32.totalorder %s92, %s93
      %p105 = scmp.eq.s32.totalorder %s20, 1
      %p106 = por %p104, %p105
      %p108 = scmp.ne.s32.totalorder %s93, %s107
      %p109 = scmp.eq.s32.totalorder %s20, 0
      %p110 = por %p108, %p109
      %s112 = sadd.s32 %s111, 1
      %p115 = scmp.eq.s32.totalorder %s14, 1
      %p116 = scmp.ne.s32.totalorder %s111, %s113
      %p117 = scmp.eq.s32.totalorder %s14, 0
      %p118 = por %p116, %p117
      %p119 = scmp.ne.s32.totalorder %s111, %s113
      %p120 = scmp.eq.s32.totalorder %s19, 1
      %p121 = por %p119, %p120
      %p122 = scmp.ne.s32.totalorder %s113, %s114
      %p123 = scmp.eq.s32.totalorder %s19, 0
      %p124 = por %p122, %p123
      %p125 = scmp.ne.s32.totalorder %s113, %s114
      %p126 = scmp.eq.s32.totalorder %s20, 1
      %p127 = por %p125, %p126
      %p129 = scmp.ne.s32.totalorder %s114, %s128
      %p130 = scmp.eq.s32.totalorder %s20, 0
      %p131 = por %p129, %p130
      %s132 = ssub.s32 %s14, %s21
      %p133 = scmp.eq.s32.totalorder %s132, 0
      %s135 = sadd.s32 %s134, 1
      %s136 = scalar_select %p133, %s134, %s135
      %p139 = pneg %p133
      %p140 = scmp.eq.s32.totalorder %s14, 1
      %p141 = por %p139, %p140
      %p142 = scmp.ne.s32.totalorder %s134, %s137
      %p143 = scmp.eq.s32.totalorder %s14, 0
      %p144 = por %p142, %p143
      %p145 = scmp.ne.s32.totalorder %s134, %s137
      %p146 = scmp.eq.s32.totalorder %s19, 1
      %p147 = por %p145, %p146
      %p148 = scmp.ne.s32.totalorder %s137, %s138
      %p149 = scmp.eq.s32.totalorder %s19, 0
      %p150 = por %p148, %p149
      %p151 = scmp.ne.s32.totalorder %s137, %s138
      %p152 = scmp.eq.s32.totalorder %s20, 1
      %p153 = por %p151, %p152
      %p155 = scmp.ne.s32.totalorder %s138, %s154
      %p156 = scmp.eq.s32.totalorder %s20, 0
      %p157 = por %p155, %p156
      %p158 = scmp.le.s32.totalorder 1, %s14
      %p159 = scmp.lt.s32.totalorder %s14, 3
      %p160 = pnand %p158, %p159
      %p161 = pneg %p160
      // Predicated region
      $region9: #{tpu_custom_call.1} parent=5 // pred_check
        _
      $region10: #{tpu_custom_call.1} parent=5 // pred_check_branch
        %163 = sbr.rel (%p160) target = $region12
      $region11: #{tpu_custom_call.1} parent=5 // pred_region
        %s164 = ssub.s32 %s14, 1
        // Predicated region
        $region13: #{tpu_custom_call.1} parent=11 // pred_check
          %p165 = pneg %p61
        $region14: #{tpu_custom_call.1} parent=11 // pred_check_branch
          %167 = sbr.rel (%p165) target = $region16
        $region15: #{tpu_custom_call.1} parent=11 // pred_region
          _
        $region16: #{tpu_custom_call.1} parent=11 // pred_fallthru
          _
        // Predicated region
        $region17: #{tpu_custom_call.1} parent=11 // pred_check
          %p168 = pneg %p82
        $region18: #{tpu_custom_call.1} parent=11 // pred_check_branch
          %170 = sbr.rel (%p168) target = $region20
        $region19: #{tpu_custom_call.1} parent=11 // pred_region
          _
        $region20: #{tpu_custom_call.1} parent=11 // pred_fallthru
          _
        // Predicated region
        $region21: #{tpu_custom_call.1} parent=11 // pred_check
          %p171 = pneg %p103
        $region22: #{tpu_custom_call.1} parent=11 // pred_check_branch
          %173 = sbr.rel (%p171) target = $region24
        $region23: #{tpu_custom_call.1} parent=11 // pred_region
          _
        $region24: #{tpu_custom_call.1} parent=11 // pred_fallthru
          _
        // Predicated region
        $region25: #{tpu_custom_call.1} parent=11 // pred_check
          %p174 = pneg %p124
        $region26: #{tpu_custom_call.1} parent=11 // pred_check_branch
          %176 = sbr.rel (%p174) target = $region28
        $region27: #{tpu_custom_call.1} parent=11 // pred_region
          _
        $region28: #{tpu_custom_call.1} parent=11 // pred_fallthru
          _
      $region12: #{tpu_custom_call.1} parent=5 // pred_fallthru
        _
      %p177 = scmp.lt.s32.totalorder %s14, 2
      // Predicated region
      $region29: #{tpu_custom_call.1} parent=5 // pred_check
        %p178 = pneg %p177
      $region30: #{tpu_custom_call.1} parent=5 // pred_check_branch
        %180 = sbr.rel (%p178) target = $region32
      $region31: #{tpu_custom_call.1} parent=5 // pred_region
        // Predicated region
        $region33: #{tpu_custom_call.1} parent=31 // pred_check
          %p181 = pneg %p34
        $region34: #{tpu_custom_call.1} parent=31 // pred_check_branch
          %183 = sbr.rel (%p181) target = $region36
        $region35: #{tpu_custom_call.1} parent=31 // pred_region
          %p184 = scmp.lt.s32.totalorder %s14, 1
          %s185 = scalar_select %p184, %s14, 1
          %s186 = smul.addr %s185, 4
          %s187 = scalar_lea.vmem %s0, %s186
        $region36: #{tpu_custom_call.1} parent=31 // pred_fallthru
          _
      $region32: #{tpu_custom_call.1} parent=5 // pred_fallthru
        _
      %p188 = scmp.le.s32.totalorder 1, %s14
      %p189 = scmp.lt.s32.totalorder %s14, 3
      %p190 = pnand %p188, %p189
      %p191 = pneg %p190
      // Predicated region
      $region37: #{tpu_custom_call.1} parent=5 // pred_check
        _
      $region38: #{tpu_custom_call.1} parent=5 // pred_check_branch
        %193 = sbr.rel (%p190) target = $region40
      $region39: #{tpu_custom_call.1} parent=5 // pred_region
        %s194 = ssub.s32 %s14, 1
        %p195 = scmp.lt.s32.totalorder %s19, 1
        %s196 = scalar_select %p195, %s19, 1
        %s197 = smul.addr %s196, 4
        %s198 = scalar_lea.vmem %s0, %s197
        %p199 = pneg %p40
        %p200 = pneg %p37
        %p201 = pneg %p61
        %p202 = pneg %p58
        %p203 = pneg %p82
        %p204 = pneg %p79
        %p205 = pneg %p103
        %p206 = pneg %p100
        %p207 = pneg %p124
        %p208 = pneg %p121
        %p209 = pneg %p150
        %p210 = pneg %p147
        %s211 = sand.u32 %s137, 1
        %s212 = scalar_lea.sflag [#allocation3], %s211
        %s213 = sand.u32 %s137, 1
        %s214 = smul.addr %s213, 8
        %s215 = scalar_lea.vmem [#allocation2], %s214
        %p216 = scmp.lt.s32.totalorder %s19, 1
        %s217 = scalar_select %p216, %s19, 1
        %s218 = smul.addr %s217, 4
        %s219 = scalar_lea.vmem %s0, %s218
        %v221 = vld [vmem:[%s219] sm:$0xf]
        %v222 = vld [vmem:[%s1] sm:$0xf]
        %v223 = vld [vmem:[%s1 + $0x4] sm:$0xf]
        %v224 = vld [vmem:[%s1 + $0x8] sm:$0xf]
        %v225 = vld [vmem:[%s1 + $0xc] sm:$0xf]
        %v226 = vld [vmem:[%s1 + $0x10] sm:$0xf]
        %v227 = vld [vmem:[%s1 + $0x14] sm:$0xf]
        %v228 = vld [vmem:[%s1 + $0x18] sm:$0xf]
        %v229 = vld [vmem:[%s1 + $0x1c] sm:$0xf]
        %v230 = vld [vmem:[%s2] sm:$0x1]
        %v232 = vperm.slane %v230, 0
        %v242 = vunpack.c.l.b16 %v222
        %v243 = vunpack.c.l.b16 %v223
        %v244 = vunpack.c.l.b16 %v224
        %v245 = vunpack.c.l.b16 %v225
        %v246 = vunpack.c.l.b16 %v226
        %v247 = vunpack.c.l.b16 %v227
        %v248 = vunpack.c.l.b16 %v228
        %v249 = vunpack.c.l.b16 %v229
        %v250 = vpack.c.b16 %v243, %v242
        %v251 = vpack.c.b16 %v245, %v244
        %v252 = vpack.c.b16 %v247, %v246
        %v253 = vpack.c.b16 %v249, %v248
        %vm254 = vcmask 261120
        %v256 = vsel %vm254, %v221, 0
        %v259 = vsel %vm254, %v250, 0
        %v262 = vsel %vm254, %v251, 0
        %v265 = vsel %vm254, %v252, 0
        %v268 = vsel %vm254, %v253, 0
        %270 = vmatpush.bf16.xpose.msra.mxu0 0
        %271 = vmatpush.bf16.xpose.msra.mxu0 0
        %272 = vmatpush.bf16.xpose.msra.mxu0 0
        %273 = vmatpush.bf16.xpose.msra.mxu0 0
        %274 = vmatpush.bf16.xpose.msra.mxu0 %v268
        %275 = vmatpush.bf16.xpose.msra.mxu0 %v265
        %276 = vmatpush.bf16.xpose.msra.mxu0 %v262
        %277 = vmatpush.bf16.xpose.msra.mxu0 %v259
        %278 = vmatmul.bf16.gmra.mxu0 %v256
        %v279 = vpop.f32.mrf.mxu0
        %v280 = vadd.f32 %v232, %v279
        %v281 = vpop.f32.mrf.mxu0
        %282 = vdwg.mxu0
        %v283 = vmax.f32 %v280, 0.0
        %v284 = vpack.c.bf16 %v283, %v283
        %v285 = vld [vmem:[%s3] sm:$0xf]
        %v286 = vld [vmem:[%s3 + $0x4] sm:$0xf]
        %v287 = vld [vmem:[%s3 + $0x8] sm:$0xf]
        %v288 = vld [vmem:[%s3 + $0xc] sm:$0xf]
        %v289 = vld [vmem:[%s3 + $0x10] sm:$0xf]
        %v290 = vld [vmem:[%s3 + $0x14] sm:$0xf]
        %v291 = vld [vmem:[%s3 + $0x18] sm:$0xf]
        %v292 = vld [vmem:[%s3 + $0x1c] sm:$0xf]
        %v293 = vld [vmem:[%s3 + $0x20] sm:$0xf]
        %v294 = vld [vmem:[%s3 + $0x24] sm:$0xf]
        %v295 = vld [vmem:[%s3 + $0x28] sm:$0xf]
        %v296 = vld [vmem:[%s3 + $0x2c] sm:$0xf]
        %v297 = vld [vmem:[%s3 + $0x30] sm:$0xf]
        %v298 = vld [vmem:[%s3 + $0x34] sm:$0xf]
        %v299 = vld [vmem:[%s3 + $0x38] sm:$0xf]
        %v300 = vld [vmem:[%s3 + $0x3c] sm:$0xf]
        %v301 = vld [vmem:[%s4] sm:$0x1]
        %v303 = vperm.slane %v301, 0
        %v321 = vunpack.c.l.b16 %v285
        %v322 = vunpack.c.l.b16 %v286
        %v323 = vunpack.c.l.b16 %v287
        %v324 = vunpack.c.l.b16 %v288
        %v325 = vunpack.c.l.b16 %v289
        %v326 = vunpack.c.l.b16 %v290
        %v327 = vunpack.c.l.b16 %v291
        %v328 = vunpack.c.l.b16 %v292
        %v329 = vunpack.c.l.b16 %v293
        %v330 = vunpack.c.l.b16 %v294
        %v331 = vunpack.c.l.b16 %v295
        %v332 = vunpack.c.l.b16 %v296
        %v333 = vunpack.c.l.b16 %v297
        %v334 = vunpack.c.l.b16 %v298
        %v335 = vunpack.c.l.b16 %v299
        %v336 = vunpack.c.l.b16 %v300
        %v337 = vpack.c.b16 %v322, %v321
        %v338 = vpack.c.b16 %v324, %v323
        %v339 = vpack.c.b16 %v326, %v325
        %v340 = vpack.c.b16 %v328, %v327
        %v341 = vpack.c.b16 %v330, %v329
        %v342 = vpack.c.b16 %v332, %v331
        %v343 = vpack.c.b16 %v334, %v333
        %v344 = vpack.c.b16 %v336, %v335
        %vm345 = vcmask 523264
        %v347 = vsel %vm345, %v284, 0
        %v350 = vsel %vm345, %v337, 0
        %v353 = vsel %vm345, %v338, 0
        %v356 = vsel %vm345, %v339, 0
        %v359 = vsel %vm345, %v340, 0
        %v362 = vsel %vm345, %v341, 0
        %v365 = vsel %vm345, %v342, 0
        %v368 = vsel %vm345, %v343, 0
        %v371 = vsel %vm345, %v344, 0
        %373 = vmatpush.bf16.xpose.msra.mxu0 %v371
        %374 = vmatpush.bf16.xpose.msra.mxu0 %v368
        %375 = vmatpush.bf16.xpose.msra.mxu0 %v365
        %376 = vmatpush.bf16.xpose.msra.mxu0 %v362
        %377 = vmatpush.bf16.xpose.msra.mxu0 %v359
        %378 = vmatpush.bf16.xpose.msra.mxu0 %v356
        %379 = vmatpush.bf16.xpose.msra.mxu0 %v353
        %380 = vmatpush.bf16.xpose.msra.mxu0 %v350
        %381 = vmatmul.bf16.gmra.mxu0 %v347
        %v382 = vpop.f32.mrf.mxu0
        %v383 = vadd.f32 %v303, %v382
        %v384 = vpop.f32.mrf.mxu0
        %385 = vdwg.mxu0
        %386 = vst [vmem:[%s215] sm:$0xff] %v383
        %s387 = sand.u32 %s137, 1
        %s388 = scalar_lea.sflag [#allocation3], %s387
        %s389 = sand.u32 %s137, 1
        %s390 = smul.addr %s389, 8
        %s391 = scalar_lea.vmem [#allocation2], %s390
        // Predicated region
        $region41: #{tpu_custom_call.1} parent=39 // pred_check
          %p392 = pneg %p147
        $region42: #{tpu_custom_call.1} parent=39 // pred_check_branch
          %394 = sbr.rel (%p392) target = $region44
        $region43: #{tpu_custom_call.1} parent=39 // pred_region
          %396 = vsyncadd %s388, 0
          %s397 = smul.addr %s19, 8
          %s398 = scalar_lea.hbm %s5, %s397
          %s400 = sshll.u32 %s391, 4
          %s401 = int_to_ptr.vmem [resolvable:$true] %s400
          %s402 = sshll.u32 %s398, 4
          %s403 = int_to_ptr.hbm [resolvable:$true] %s402
          %405 = dma.vmem_to_hbm [thread:$0]  %s401, 128, %s403, %s388
        $region44: #{tpu_custom_call.1} parent=39 // pred_fallthru
          _
      $region40: #{tpu_custom_call.1} parent=5 // pred_fallthru
        _
      %p406 = scmp.le.s32.totalorder 2, %s14
      // Predicated region
      $region45: #{tpu_custom_call.1} parent=5 // pred_check
        %p407 = pneg %p406
      $region46: #{tpu_custom_call.1} parent=5 // pred_check_branch
        %409 = sbr.rel (%p407) target = $region48
      $region47: #{tpu_custom_call.1} parent=5 // pred_region
        %s410 = ssub.s32 %s14, 2
        // Predicated region
        $region49: #{tpu_custom_call.1} parent=47 // pred_check
          %p411 = pneg %p153
        $region50: #{tpu_custom_call.1} parent=47 // pred_check_branch
          %413 = sbr.rel (%p411) target = $region52
        $region51: #{tpu_custom_call.1} parent=47 // pred_region
          %s414 = sand.u32 %s138, 1
          %s415 = scalar_lea.sflag [#allocation3], %s414
          %s416 = sand.u32 %s138, 1
          %s417 = smul.addr %s416, 8
          %s418 = scalar_lea.vmem [#allocation2], %s417
          %420 = dma.done %s415, 128
        $region52: #{tpu_custom_call.1} parent=47 // pred_fallthru
          _
      $region48: #{tpu_custom_call.1} parent=5 // pred_fallthru
        _
    $region6: #{tpu_custom_call.1} parent=1 // loop_footer
      %s18 = sadd.s32 1, %s14
    $region7: #{tpu_custom_call.1} parent=1 // loop_footer_branch
      %13 = sbr.rel target = $region3
    $region8: #{tpu_custom_call.1} parent=1 // loop_exit
      _
    %421 = vsyncpa [#allocation3], 1
    %s422 = scalar_lea.sflag [#allocation3], 1
    %423 = vsyncpa %s422, 1

</llo_original>
